<compile_context>
chip_gen: v7x
topology: tpu7x:2x2x1
jax: 0.10.0
libtpu: 0.0.40
codegen_flags: <defaults>
</compile_context>

<pallas_src>
import functools

import jax
import jax.numpy as jnp
from jax.experimental import pallas as pl
from jax.experimental.pallas import tpu as pltpu


_EPS = 1e-12  # F.normalize default eps


def _simple_rms_norm_kernel(x_ref, o_ref, *, scale, eps):
    x = x_ref[...].astype(jnp.float32)                     # (tm, D) f32 working copy
    sq_sum = jnp.sum(x * x, axis=-1, keepdims=True)        # (tm, 1)
    # max(||x||, eps) == sqrt(max(sum_sq, eps^2)); eps^2 = 1e-24 is fine in f32.
    # Fold dim**-0.5 into the per-row scalar; rsqrt lowers to the EUP.
    inv = scale * jax.lax.rsqrt(jnp.maximum(sq_sum, eps * eps))
    o_ref[...] = (x * inv).astype(o_ref.dtype)


def _round_up(x, m):
    return ((x + m - 1) // m) * m


def _choose_tiling(rows, dim, dtype):
    """Pick (row_tile, vmem_limit_bytes) from the chip's VMEM capacity."""
    itemsize = jnp.dtype(dtype).itemsize
    # Sublane packing: 8 rows for 32-bit, 16 for 16-bit, 32 for 8-bit dtypes.
    sublane = max(8, 32 // itemsize)

    try:
        vmem_cap = int(pltpu.get_tpu_info().vmem_capacity_bytes)
    except Exception:
        vmem_cap = 64 * 1024 * 1024   # conservative (v7x-sized) fallback

    # Raise the scoped VMEM limit but leave headroom for compiler scratch.
    vmem_limit = max(32 * 1024 * 1024,
                     min(int(vmem_cap * 3 // 4), 96 * 1024 * 1024))

    # Per-row VMEM cost: double-buffered in + out blocks plus the f32 working
    # copies made inside the kernel (upcast x and the scaled result).
    per_row = dim * (2 * itemsize + 2 * itemsize + 2 * 4)
    budget = min(vmem_limit // 2, 40 * 1024 * 1024)

    tile = budget // max(per_row, 1)
    tile = (tile // sublane) * sublane
    tile = max(sublane, min(tile, 1024))
    # Don't request a block far larger than the actual row count.
    tile = min(tile, _round_up(rows, sublane))
    return int(tile), int(vmem_limit)


def simple_rms_norm(x):
    """x: (..., dim). Returns F.normalize(x, dim=-1) * dim**-0.5 via Pallas."""
    orig_shape = x.shape
    dim = orig_shape[-1]
    scale = float(dim) ** (-0.5)

    x2d = x.reshape(-1, dim)
    rows = x2d.shape[0]

    row_tile, vmem_limit = _choose_tiling(rows, dim, x.dtype)
    grid = (max(1, pl.cdiv(rows, row_tile)),)

    kernel = functools.partial(_simple_rms_norm_kernel, scale=scale, eps=_EPS)

    out = pl.pallas_call(
        kernel,
        out_shape=jax.ShapeDtypeStruct((rows, dim), x.dtype),
        grid_spec=pltpu.PrefetchScalarGridSpec(
            num_scalar_prefetch=0,
            grid=grid,
            in_specs=[pl.BlockSpec((row_tile, dim), lambda i: (i, 0))],
            out_specs=pl.BlockSpec((row_tile, dim), lambda i: (i, 0)),
        ),
        compiler_params=pltpu.CompilerParams(
            dimension_semantics=("parallel",),  # multi-TC chips split the row grid
            vmem_limit_bytes=vmem_limit,
        ),
    )(x2d)

    return out.reshape(orig_shape)


def _reference(x):
    xf = x.astype(jnp.float32)
    norm = jnp.sqrt(jnp.sum(xf * xf, axis=-1, keepdims=True))
    return (xf / jnp.maximum(norm, _EPS) * (x.shape[-1] ** -0.5)).astype(x.dtype)


if __name__ == "__main__":
    key = jax.random.PRNGKey(0)

    # Small shape matching the module's usage (batch, seq, dim).
    batch, seq, dim = 2, 8, 32
    x = jax.random.normal(key, (batch, seq, dim), dtype=jnp.float32)
    y = jax.block_until_ready(simple_rms_norm(x))
    ref = _reference(x)
    assert y.shape == x.shape
    assert jnp.allclose(y, ref, atol=1e-5, rtol=1e-5)

    # Ragged row count + lane-dense dim: exercises the partial last block
    # (masked writeback, no host-side pad) and confirms no NaN leaks in.
    x2 = jax.random.normal(jax.random.PRNGKey(0), (3, 7, 128), dtype=jnp.float32)
    y2 = jax.block_until_ready(simple_rms_norm(x2))
    ref2 = _reference(x2)
    assert y2.shape == x2.shape
    assert not jnp.any(jnp.isnan(y2))
    assert jnp.allclose(y2, ref2, atol=1e-5, rtol=1e-5)

    # bf16 path: verifies the f32 upcast inside the kernel and cast-back.
    x3 = jax.random.normal(jax.random.PRNGKey(1), (2, 10, 512), dtype=jnp.bfloat16)
    y3 = jax.block_until_ready(simple_rms_norm(x3))
    ref3 = _reference(x3)
    assert y3.shape == x3.shape
    assert jnp.allclose(y3.astype(jnp.float32), ref3.astype(jnp.float32),
                        atol=2e-2, rtol=2e-2)

    print("KERNEL_OK")
</pallas_src>

<mosaic_0001>
module attributes {stable_mosaic.version = 11 : i64} {
  func.func @_simple_rms_norm_kernel(%arg0: i32, %arg1: memref<16x32xf32, #tpu.memory_space<vmem>>, %arg2: memref<16x32xf32, #tpu.memory_space<vmem>>) attributes {dimension_semantics = [#tpu.dimension_semantics<parallel>], iteration_bounds = array<i64: 1>, scalar_prefetch = 0 : i64, scratch_operands = 0 : i64, tpu.core_type = #tpu.core_type<tc>, window_params = [{transform_indices = @transform_0, window_bounds = array<i64: 16, 32>}, {transform_indices = @transform_1, window_bounds = array<i64: 16, 32>}]} {
    %c0 = arith.constant 0 : index
    %c0_0 = arith.constant 0 : index
    %0 = vector.load %arg1[%c0, %c0_0] : memref<16x32xf32, #tpu.memory_space<vmem>>, vector<16x32xf32>
    %1 = arith.mulf %0, %0 : vector<16x32xf32>
    %cst = arith.constant dense<0.000000e+00> : vector<16xf32>
    %2 = vector.multi_reduction <add>, %1, %cst [1] : vector<16x32xf32> to vector<16xf32>
    %3 = vector.shape_cast %2 : vector<16xf32> to vector<16x1xf32>
    %cst_1 = arith.constant 1.000000e-24 : f32
    %4 = vector.broadcast %cst_1 : f32 to vector<16x1xf32>
    %5 = arith.maximumf %3, %4 : vector<16x1xf32>
    %6 = math.rsqrt %5 : vector<16x1xf32>
    %cst_2 = arith.constant 0.176776692 : f32
    %7 = vector.broadcast %cst_2 : f32 to vector<16x1xf32>
    %8 = arith.mulf %7, %6 : vector<16x1xf32>
    %9 = vector.broadcast %8 : vector<16x1xf32> to vector<16x32xf32>
    %10 = arith.mulf %0, %9 : vector<16x32xf32>
    %c0_3 = arith.constant 0 : index
    %c0_4 = arith.constant 0 : index
    %11 = vector.load %arg2[%c0_3, %c0_4] : memref<16x32xf32, #tpu.memory_space<vmem>>, vector<16x32xf32>
    tpu.vector_store %arg2[%c0_3, %c0_4], %10 {strides = array<i32>} : memref<16x32xf32, #tpu.memory_space<vmem>>, vector<16x32xf32>,
    return
  }
  func.func @transform_0(%arg0: i32) -> (i32, i32) {
    %c0_i32 = arith.constant 0 : i32
    %c0_i32_0 = arith.constant 0 : i32
    return %arg0, %c0_i32 : i32, i32
  }
  func.func @transform_1(%arg0: i32) -> (i32, i32) {
    %c0_i32 = arith.constant 0 : i32
    %c0_i32_0 = arith.constant 0 : i32
    return %arg0, %c0_i32 : i32, i32
  }
}

</mosaic_0001>

<llo_original>
// kernel: tpu_custom_call.1
$region0: #{tpu_custom_call.1}
  #allocation0 [shape = 'u32[]', space=smem, size = 0x4, offset = 0x4, fixed_abs, tag = 'smem constant byte address 0x4 - core index']
  #allocation1 [shape = 'u32[144,128]{1,0:T(1,128)}', space=vmem, size = 0x12000, scoped, tag = 'internal scratch']
  %s0 = inlined_call_operand.hbm [shape: f32[16,32], index: 0, kind: input, shape index: {}]
  %s1 = inlined_call_operand.hbm [shape: f32[16,32], index: 1, kind: output, shape index: {}]
  %s2 = sld [smem:[#allocation0]]
  $region18: #{tpu_custom_call.1} parent=0
    _
  %s4 = ssub.s32 1, %s2
  %s5 = scalar_select 0, %s4, %s2
  $region1: #{tpu_custom_call.1} parent=0
    #allocation2 [shape = 'u8[8192]{0}', space=vmem, size = 0x2000, scoped, tag = 'input window, operand 0, single buffered']
    #allocation3 [shape = 's32[1]{0}', space=sflag, size = 0x4, scoped, tag = 'scoped memory for tpu_custom_call.1']
    #allocation4 [shape = 's32[1]{0}', space=sflag, size = 0x4, scoped, tag = 'scoped memory for tpu_custom_call.1']
    #allocation5 [shape = 'u8[8192]{0}', space=vmem, size = 0x2000, scoped, tag = 'output window, operand 0, single buffered']
    %6 = vsyncpa [#allocation3], 0
    %7 = vsyncpa [#allocation4], 0
    // Predicated region
    $region2: #{tpu_custom_call.1} parent=1 // pred_check
      _
    $region3: #{tpu_custom_call.1} parent=1 // pred_check_branch
      %9 = sbr.rel (0) target = $region5
    $region4: #{tpu_custom_call.1} parent=1 // pred_region
      %s11 = ssub.s32 256, 256
      %12 = vsyncadd [#allocation3], %s11
      %s13 = sshll.u32 [#allocation2], 4
      %s14 = int_to_ptr.vmem [resolvable:$true] %s13
      %19 = dma.hbm_to_vmem [thread:$0]  %s0, 256, %s14, [#allocation3], 128, 128, 8
    $region5: #{tpu_custom_call.1} parent=1 // pred_fallthru
      _
    // Predicated region
    $region6: #{tpu_custom_call.1} parent=1 // pred_check
      _
    $region7: #{tpu_custom_call.1} parent=1 // pred_check_branch
      %21 = sbr.rel (0) target = $region9
    $region8: #{tpu_custom_call.1} parent=1 // pred_region
      %22 = dma.done [#allocation3], 256
    $region9: #{tpu_custom_call.1} parent=1 // pred_fallthru
      _
    %v23 = vld [vmem:[#allocation2] sm:$0xff]
    %v24 = vld [vmem:[#allocation2 + $0x8] sm:$0xff]
    %v25 = vmul.f32 %v23, %v23
    %v26 = vmul.f32 %v24, %v24
    %vm27 = vcmask 261120
    %v28 = vsel %vm27, %v25, 0.0
    %29 = vadd.xlane.f32.xlu0 %v28
    %v30 = vpop.xlane.xlu0 %29
    %v31 = vsel %vm27, %v26, 0.0
    %32 = vadd.xlane.f32.xlu0 %v31
    %v33 = vpop.xlane.xlu0 %32
    %v34 = vmax.f32 %v30, 1e-24
    %v35 = vmax.f32 %v33, 1e-24
    %v36 = vrsqrt.pop %v34
    %v37 = vrsqrt.pop %v35
    %v38 = vmul.f32 %v36, 0.17677669
    %v39 = vmul.f32 %v37, 0.17677669
    %v40 = vmul.f32 %v23, %v38
    %v41 = vmul.f32 %v24, %v39
    %42 = vst.msk [vmem:[#allocation5] sm:$0xff] %vm27, %v40
    %43 = vst.msk [vmem:[#allocation5 + $0x8] sm:$0xff] %vm27, %v41
    // Predicated region
    $region10: #{tpu_custom_call.1} parent=1 // pred_check
      _
    $region11: #{tpu_custom_call.1} parent=1 // pred_check_branch
      %45 = sbr.rel (0) target = $region13
    $region12: #{tpu_custom_call.1} parent=1 // pred_region
      %s47 = ssub.s32 256, 256
      %48 = vsyncadd [#allocation4], %s47
      %s49 = sshll.u32 [#allocation5], 4
      %s50 = int_to_ptr.vmem [resolvable:$true] %s49
      %55 = dma.vmem_to_hbm [thread:$0]  %s50, 256, %s1, [#allocation4], 128, 128, 8
    $region13: #{tpu_custom_call.1} parent=1 // pred_fallthru
      _
    // Predicated region
    $region14: #{tpu_custom_call.1} parent=1 // pred_check
      _
    $region15: #{tpu_custom_call.1} parent=1 // pred_check_branch
      %57 = sbr.rel (0) target = $region17
    $region16: #{tpu_custom_call.1} parent=1 // pred_region
      %58 = dma.done [#allocation4], 256
    $region17: #{tpu_custom_call.1} parent=1 // pred_fallthru
      _
    %59 = vsyncpa [#allocation3], 1
    %60 = vsyncpa [#allocation4], 1

</llo_original>
